<compile_context>
chip_gen: v7x
topology: tpu7x:2x2x1
jax: 0.10.0
libtpu: 0.0.40
codegen_flags: <defaults>
</compile_context>

<pallas_src>
import math
from functools import lru_cache

import numpy as np
import jax
import jax.numpy as jnp
from jax.experimental import pallas as pl
from jax.experimental.pallas import tpu as pltpu  # noqa: F401  (kept for TPU-specific params if needed)


# rows of the packed (8, D) bias / LayerNorm-parameter slab
_ROW_BE, _ROW_GAMMA, _ROW_BETA, _ROW_BQ, _ROW_BK, _ROW_BV, _ROW_BO = range(7)


# ----------------------------- Pallas kernel -------------------------------- #
def cross_attention_kernel(emb_ref, nm_ref, pt_ref, we_ref, w_ref, bias_ref, out_ref):
    """Single invocation, whole batch resident in VMEM (everything is tiny here)."""
    B, L, D = emb_ref.shape
    _, C, HW = nm_ref.shape
    S = pt_ref.shape[1]
    f32, bf16 = jnp.float32, jnp.bfloat16

    emb = emb_ref[...]                                   # (B, L, D) f32 (detach = fwd no-op)
    emb_flat = emb.reshape(B * L, D)                     # free leading-dim merge

    # --- pool (AvgPool2d(2) as a matmul), batch folded into M ------------------
    x_flat = nm_ref[...].reshape(B * C, HW)              # bf16, free leading-dim merge
    pooled = jnp.dot(x_flat, pt_ref[...],
                     preferred_element_type=f32)         # (B*C, S), lane-dense in S

    # --- flatten + permute + embedder (Linear C -> D) --------------------------
    # One small (C, S) transpose per batch, then a single flat (B*S, C) @ (C, D) matmul.
    tokens = pooled.reshape(B, C, S).swapaxes(1, 2).reshape(B * S, C)
    kv = jnp.dot(tokens.astype(bf16), we_ref[...],
                 preferred_element_type=f32)
    kv = kv + bias_ref[_ROW_BE:_ROW_BE + 1, :]           # (B*S, D)

    # --- norm: LayerNorm over D (eps = 1e-5), f32 -------------------------------
    mu = jnp.mean(kv, axis=-1, keepdims=True)
    var = jnp.mean((kv - mu) ** 2, axis=-1, keepdims=True)
    kvn = (kv - mu) * jax.lax.rsqrt(var + 1e-5)
    kvn = kvn * bias_ref[_ROW_GAMMA:_ROW_GAMMA + 1, :] \
              + bias_ref[_ROW_BETA:_ROW_BETA + 1, :]     # (B*S, D)
    kvn_b = kvn.astype(bf16)

    # --- projections, batch folded into M; weights sliced on the leading axis ---
    # w_ref rows: 0=Wq (1/sqrt(D) pre-folded), 1=Wk, 2=Wv, 3=Wo
    q = jnp.dot(emb_flat.astype(bf16), w_ref[0],
                preferred_element_type=f32) + bias_ref[_ROW_BQ:_ROW_BQ + 1, :]   # (B*L, D)
    k = jnp.dot(kvn_b, w_ref[1],
                preferred_element_type=f32) + bias_ref[_ROW_BK:_ROW_BK + 1, :]   # (B*S, D)
    v = jnp.dot(kvn_b, w_ref[2],
                preferred_element_type=f32) + bias_ref[_ROW_BV:_ROW_BV + 1, :]   # (B*S, D)

    q = q.reshape(B, L, D)        # free leading-dim splits
    k = k.reshape(B, S, D)
    v = v.reshape(B, S, D)

    # --- single-head cross attention (scale already folded into Wq / bq) --------
    scores = jnp.einsum('bld,bsd->bls', q.astype(bf16), k.astype(bf16),
                        preferred_element_type=f32)                              # (B, L, S)
    scores = scores - jnp.max(scores, axis=-1, keepdims=True)
    p = jnp.exp(scores)
    p = p * pl.reciprocal(jnp.sum(p, axis=-1, keepdims=True), approx=True)

    ctx = jnp.einsum('bls,bsd->bld', p.astype(bf16), v.astype(bf16),
                     preferred_element_type=f32)                                  # (B, L, D)

    dec = jnp.dot(ctx.reshape(B * L, D).astype(bf16), w_ref[3],
                  preferred_element_type=f32) + bias_ref[_ROW_BO:_ROW_BO + 1, :]  # (B*L, D)

    # residual; direct (B, L, D) store (no lane reshape)
    out_ref[...] = (emb_flat + dec).reshape(B, L, D)


# ------------------------------ host-side prep ------------------------------- #
@lru_cache(maxsize=None)
def _pool_matrix_t(H, W, k=2):
    """(H*W, S) matrix Pt such that x(C, H*W) @ Pt == AvgPool2d(k) + Flatten, transposed."""
    Hp, Wp = H // k, W // k
    P = np.zeros((Hp * Wp, H * W), np.float32)
    for ph in range(Hp):
        for pw in range(Wp):
            s = ph * Wp + pw
            for dh in range(k):
                for dw in range(k):
                    P[s, (ph * k + dh) * W + (pw * k + dw)] = 1.0 / (k * k)
    return P.T                                                             # (H*W, S)


def prepare_params(params, H, W, pool_k=2):
    """One-time packing / casting / scale-folding — keep this OUT of the hot path."""
    D = params["Wq"].shape[0]
    scale = 1.0 / math.sqrt(D)
    Pt = jnp.asarray(_pool_matrix_t(H, W, pool_k)).astype(jnp.bfloat16)    # 0.25 exact in bf16
    W_stack = jnp.stack(
        [params["Wq"] * scale, params["Wk"], params["Wv"], params["Wo"]],
        axis=0).astype(jnp.bfloat16)                                       # (4, D, D)
    bias = jnp.concatenate(
        [params["be"], params["gamma"], params["beta"], params["bq"] * scale,
         params["bk"], params["bv"], params["bo"],
         jnp.zeros((1, D), jnp.float32)], axis=0)                          # (8, D) f32
    return {
        "Pt": Pt,
        "We": params["We"].astype(jnp.bfloat16),                          # (C, D)
        "W": W_stack,
        "bias": bias,
    }


@jax.jit
def _forward_impl(embeddings, noise_maps, Pt, We, W_stack, bias):
    B, L, D = embeddings.shape
    _, C, H, Wd = noise_maps.shape
    # NCHW -> (B, C, H*W): free reshape; cast to bf16 to halve the HBM->VMEM bytes.
    nm = noise_maps.reshape(B, C, H * Wd).astype(jnp.bfloat16)
    return pl.pallas_call(
        cross_attention_kernel,
        out_shape=jax.ShapeDtypeStruct((B, L, D), jnp.float32),
    )(embeddings, nm, Pt, We, W_stack, bias)


def cross_attention_forward(embeddings, noise_maps, num_embs_per_map, prepared):
    """embeddings: (B, L, D) f32; noise_maps: (B, C, H, W) f32 (NCHW, like PyTorch)."""
    L = embeddings.shape[1]
    # TODO(synk): ragged num_embs_per_map (variable embeddings per map) is not supported;
    # this instantiation assumes a uniform count per map.
    assert all(n == L for n in num_embs_per_map)
    return _forward_impl(embeddings, noise_maps, prepared["Pt"], prepared["We"],
                         prepared["W"], prepared["bias"])


# ----------------------------- pure-JAX reference ---------------------------- #
def reference_forward(embeddings, noise_maps, params):
    B, C, H, W = noise_maps.shape
    D = embeddings.shape[-1]
    pooled = noise_maps.reshape(B, C, H // 2, 2, W // 2, 2).mean(axis=(3, 5))
    tokens = jnp.transpose(pooled.reshape(B, C, -1), (0, 2, 1))            # (B, S, C)
    kv = tokens @ params["We"] + params["be"]
    mu = kv.mean(-1, keepdims=True)
    var = ((kv - mu) ** 2).mean(-1, keepdims=True)
    kvn = (kv - mu) / jnp.sqrt(var + 1e-5) * params["gamma"] + params["beta"]
    q = embeddings @ params["Wq"] + params["bq"]
    k = kvn @ params["Wk"] + params["bk"]
    v = kvn @ params["Wv"] + params["bv"]
    s = (q @ jnp.transpose(k, (0, 2, 1))) / math.sqrt(D)
    p = jax.nn.softmax(s, axis=-1)
    dec = (p @ v) @ params["Wo"] + params["bo"]
    return embeddings + dec


# ----------------------------------- main ------------------------------------ #
if __name__ == "__main__":
    B, C, H, W = 2, 4, 16, 16     # noise_maps NCHW
    L, D = 8, 32                  # embeddings per map, hidden dim
    num_embs_per_map = [L] * B

    key = jax.random.PRNGKey(0)
    ks = jax.random.split(key, 12)

    embeddings = jax.random.normal(ks[0], (B, L, D), jnp.float32)
    noise_maps = jax.random.normal(ks[1], (B, C, H, W), jnp.float32)

    def lin(k, fan_in, shape):
        return jax.random.normal(k, shape, jnp.float32) / math.sqrt(fan_in)

    params = {
        "We": lin(ks[2], C, (C, D)), "be": jnp.zeros((1, D), jnp.float32),
        "gamma": jnp.ones((1, D), jnp.float32), "beta": jnp.zeros((1, D), jnp.float32),
        "Wq": lin(ks[3], D, (D, D)), "bq": jnp.zeros((1, D), jnp.float32),
        "Wk": lin(ks[4], D, (D, D)), "bk": jnp.zeros((1, D), jnp.float32),
        "Wv": lin(ks[5], D, (D, D)), "bv": jnp.zeros((1, D), jnp.float32),
        "Wo": lin(ks[6], D, (D, D)), "bo": jnp.zeros((1, D), jnp.float32),
    }

    prepared = prepare_params(params, H, W)    # one-time packing (off the hot path)

    out = cross_attention_forward(embeddings, noise_maps, num_embs_per_map, prepared)
    out = jax.block_until_ready(out)

    ref = reference_forward(embeddings, noise_maps, params)
    assert out.shape == (B, L, D)
    # bf16 MXU operands (f32 accumulation) + approx-reciprocal softmax denominator give
    # ~1e-2-level deviation from the exact f32 reference; compare at a matching tolerance.
    max_err = float(jnp.max(jnp.abs(out - ref)))
    assert jnp.allclose(out, ref, atol=5e-2, rtol=5e-2), \
        f"mismatch vs reference (max abs err {max_err:.3e})"

    # TODO(synk): embeddings.detach() is an autograd-only no-op; forward math is identical.
    print("KERNEL_OK")
</pallas_src>

<mosaic_0001>
module attributes {stable_mosaic.version = 11 : i64} {
  func.func @cross_attention_kernel(%arg0: memref<2x8x32xf32, #tpu.memory_space<vmem>>, %arg1: memref<2x4x256xbf16, #tpu.memory_space<vmem>>, %arg2: memref<256x64xbf16, #tpu.memory_space<vmem>>, %arg3: memref<4x32xbf16, #tpu.memory_space<vmem>>, %arg4: memref<4x32x32xbf16, #tpu.memory_space<vmem>>, %arg5: memref<8x32xf32, #tpu.memory_space<vmem>>, %arg6: memref<2x8x32xf32, #tpu.memory_space<vmem>>) attributes {dimension_semantics = [], scalar_prefetch = 0 : i64, scratch_operands = 0 : i64, tpu.core_type = #tpu.core_type<tc>} {
    %c0 = arith.constant 0 : index
    %c0_0 = arith.constant 0 : index
    %c0_1 = arith.constant 0 : index
    %0 = vector.load %arg0[%c0, %c0_0, %c0_1] : memref<2x8x32xf32, #tpu.memory_space<vmem>>, vector<2x8x32xf32>
    %1 = vector.shape_cast %0 : vector<2x8x32xf32> to vector<16x32xf32>
    %c0_2 = arith.constant 0 : index
    %c0_3 = arith.constant 0 : index
    %c0_4 = arith.constant 0 : index
    %2 = vector.load %arg1[%c0_2, %c0_3, %c0_4] : memref<2x4x256xbf16, #tpu.memory_space<vmem>>, vector<2x4x256xbf16>
    %3 = vector.shape_cast %2 : vector<2x4x256xbf16> to vector<8x256xbf16>
    %c0_5 = arith.constant 0 : index
    %c0_6 = arith.constant 0 : index
    %4 = vector.load %arg2[%c0_5, %c0_6] : memref<256x64xbf16, #tpu.memory_space<vmem>>, vector<256x64xbf16>
    %cst = arith.constant dense<0.000000e+00> : vector<8x64xf32>
    %5 = tpu.matmul %3, %4, %cst {dimension_numbers = #tpu.dot_dimension_numbers<[1], [0], [0], [1], [0, 0, 1, 1], [], []>} : vector<8x256xbf16>, vector<256x64xbf16>, vector<8x64xf32> -> vector<8x64xf32>
    %6 = vector.shape_cast %5 : vector<8x64xf32> to vector<2x4x64xf32>
    %7 = tpu.transpose %6, [0, 2, 1] : vector<2x4x64xf32> -> vector<2x64x4xf32>
    %8 = vector.shape_cast %7 : vector<2x64x4xf32> to vector<128x4xf32>
    %9 = arith.truncf %8 : vector<128x4xf32> to vector<128x4xbf16>
    %c0_7 = arith.constant 0 : index
    %c0_8 = arith.constant 0 : index
    %10 = vector.load %arg3[%c0_7, %c0_8] : memref<4x32xbf16, #tpu.memory_space<vmem>>, vector<4x32xbf16>
    %cst_9 = arith.constant dense<0.000000e+00> : vector<128x32xf32>
    %11 = tpu.matmul %9, %10, %cst_9 {dimension_numbers = #tpu.dot_dimension_numbers<[1], [0], [0], [1], [0, 0, 1, 1], [], []>} : vector<128x4xbf16>, vector<4x32xbf16>, vector<128x32xf32> -> vector<128x32xf32>
    %c0_10 = arith.constant 0 : index
    %c0_11 = arith.constant 0 : index
    %12 = vector.load %arg5[%c0_10, %c0_11] : memref<8x32xf32, #tpu.memory_space<vmem>>, vector<1x32xf32>
    %13 = vector.broadcast %12 : vector<1x32xf32> to vector<128x32xf32>
    %14 = arith.addf %11, %13 : vector<128x32xf32>
    %cst_12 = arith.constant dense<0.000000e+00> : vector<128xf32>
    %15 = vector.multi_reduction <add>, %14, %cst_12 [1] : vector<128x32xf32> to vector<128xf32>
    %16 = vector.shape_cast %15 : vector<128xf32> to vector<128x1xf32>
    %cst_13 = arith.constant 3.200000e+01 : f32
    %17 = vector.broadcast %cst_13 : f32 to vector<128x1xf32>
    %18 = arith.divf %16, %17 : vector<128x1xf32>
    %19 = vector.broadcast %18 : vector<128x1xf32> to vector<128x32xf32>
    %20 = arith.subf %14, %19 : vector<128x32xf32>
    %21 = arith.mulf %20, %20 : vector<128x32xf32>
    %cst_14 = arith.constant dense<0.000000e+00> : vector<128xf32>
    %22 = vector.multi_reduction <add>, %21, %cst_14 [1] : vector<128x32xf32> to vector<128xf32>
    %23 = vector.shape_cast %22 : vector<128xf32> to vector<128x1xf32>
    %cst_15 = arith.constant 3.200000e+01 : f32
    %24 = vector.broadcast %cst_15 : f32 to vector<128x1xf32>
    %25 = arith.divf %23, %24 : vector<128x1xf32>
    %26 = vector.broadcast %18 : vector<128x1xf32> to vector<128x32xf32>
    %27 = arith.subf %14, %26 : vector<128x32xf32>
    %cst_16 = arith.constant 9.99999974E-6 : f32
    %28 = vector.broadcast %cst_16 : f32 to vector<128x1xf32>
    %29 = arith.addf %25, %28 : vector<128x1xf32>
    %30 = math.rsqrt %29 : vector<128x1xf32>
    %31 = vector.broadcast %30 : vector<128x1xf32> to vector<128x32xf32>
    %32 = arith.mulf %27, %31 : vector<128x32xf32>
    %c1 = arith.constant 1 : index
    %c0_17 = arith.constant 0 : index
    %33 = vector.load %arg5[%c1, %c0_17] : memref<8x32xf32, #tpu.memory_space<vmem>>, vector<1x32xf32>
    %34 = vector.broadcast %33 : vector<1x32xf32> to vector<128x32xf32>
    %35 = arith.mulf %32, %34 : vector<128x32xf32>
    %c2 = arith.constant 2 : index
    %c0_18 = arith.constant 0 : index
    %36 = vector.load %arg5[%c2, %c0_18] : memref<8x32xf32, #tpu.memory_space<vmem>>, vector<1x32xf32>
    %37 = vector.broadcast %36 : vector<1x32xf32> to vector<128x32xf32>
    %38 = arith.addf %35, %37 : vector<128x32xf32>
    %39 = arith.truncf %38 : vector<128x32xf32> to vector<128x32xbf16>
    %40 = arith.truncf %1 : vector<16x32xf32> to vector<16x32xbf16>
    %c0_19 = arith.constant 0 : index
    %c0_20 = arith.constant 0 : index
    %c0_21 = arith.constant 0 : index
    %41 = vector.load %arg4[%c0_19, %c0_20, %c0_21] : memref<4x32x32xbf16, #tpu.memory_space<vmem>>, vector<1x32x32xbf16>
    %42 = vector.shape_cast %41 : vector<1x32x32xbf16> to vector<32x32xbf16>
    %cst_22 = arith.constant dense<0.000000e+00> : vector<16x32xf32>
    %43 = tpu.matmul %40, %42, %cst_22 {dimension_numbers = #tpu.dot_dimension_numbers<[1], [0], [0], [1], [0, 0, 1, 1], [], []>} : vector<16x32xbf16>, vector<32x32xbf16>, vector<16x32xf32> -> vector<16x32xf32>
    %c3 = arith.constant 3 : index
    %c0_23 = arith.constant 0 : index
    %44 = vector.load %arg5[%c3, %c0_23] : memref<8x32xf32, #tpu.memory_space<vmem>>, vector<1x32xf32>
    %45 = vector.broadcast %44 : vector<1x32xf32> to vector<16x32xf32>
    %46 = arith.addf %43, %45 : vector<16x32xf32>
    %c1_24 = arith.constant 1 : index
    %c0_25 = arith.constant 0 : index
    %c0_26 = arith.constant 0 : index
    %47 = vector.load %arg4[%c1_24, %c0_25, %c0_26] : memref<4x32x32xbf16, #tpu.memory_space<vmem>>, vector<1x32x32xbf16>
    %48 = vector.shape_cast %47 : vector<1x32x32xbf16> to vector<32x32xbf16>
    %cst_27 = arith.constant dense<0.000000e+00> : vector<128x32xf32>
    %49 = tpu.matmul %39, %48, %cst_27 {dimension_numbers = #tpu.dot_dimension_numbers<[1], [0], [0], [1], [0, 0, 1, 1], [], []>} : vector<128x32xbf16>, vector<32x32xbf16>, vector<128x32xf32> -> vector<128x32xf32>
    %c4 = arith.constant 4 : index
    %c0_28 = arith.constant 0 : index
    %50 = vector.load %arg5[%c4, %c0_28] : memref<8x32xf32, #tpu.memory_space<vmem>>, vector<1x32xf32>
    %51 = vector.broadcast %50 : vector<1x32xf32> to vector<128x32xf32>
    %52 = arith.addf %49, %51 : vector<128x32xf32>
    %c2_29 = arith.constant 2 : index
    %c0_30 = arith.constant 0 : index
    %c0_31 = arith.constant 0 : index
    %53 = vector.load %arg4[%c2_29, %c0_30, %c0_31] : memref<4x32x32xbf16, #tpu.memory_space<vmem>>, vector<1x32x32xbf16>
    %54 = vector.shape_cast %53 : vector<1x32x32xbf16> to vector<32x32xbf16>
    %cst_32 = arith.constant dense<0.000000e+00> : vector<128x32xf32>
    %55 = tpu.matmul %39, %54, %cst_32 {dimension_numbers = #tpu.dot_dimension_numbers<[1], [0], [0], [1], [0, 0, 1, 1], [], []>} : vector<128x32xbf16>, vector<32x32xbf16>, vector<128x32xf32> -> vector<128x32xf32>
    %c5 = arith.constant 5 : index
    %c0_33 = arith.constant 0 : index
    %56 = vector.load %arg5[%c5, %c0_33] : memref<8x32xf32, #tpu.memory_space<vmem>>, vector<1x32xf32>
    %57 = vector.broadcast %56 : vector<1x32xf32> to vector<128x32xf32>
    %58 = arith.addf %55, %57 : vector<128x32xf32>
    %59 = vector.shape_cast %46 : vector<16x32xf32> to vector<2x8x32xf32>
    %60 = vector.shape_cast %52 : vector<128x32xf32> to vector<2x64x32xf32>
    %61 = vector.shape_cast %58 : vector<128x32xf32> to vector<2x64x32xf32>
    %62 = arith.truncf %59 : vector<2x8x32xf32> to vector<2x8x32xbf16>
    %63 = arith.truncf %60 : vector<2x64x32xf32> to vector<2x64x32xbf16>
    "tpu.trace_start"() <{level = 10 : i32, message = "bld,bsd->bls"}> : () -> ()
    %cst_34 = arith.constant dense<0.000000e+00> : vector<2x8x64xf32>
    %64 = tpu.matmul %62, %63, %cst_34 {dimension_numbers = #tpu.dot_dimension_numbers<[2], [2], [1], [1], [0, 0, 0, 1, 1, 1], [0], [0]>} : vector<2x8x32xbf16>, vector<2x64x32xbf16>, vector<2x8x64xf32> -> vector<2x8x64xf32>
    "tpu.trace_stop"() : () -> ()
    %cst_35 = arith.constant dense<0xFF800000> : vector<2x8xf32>
    %65 = vector.multi_reduction <maximumf>, %64, %cst_35 [2] : vector<2x8x64xf32> to vector<2x8xf32>
    %66 = vector.shape_cast %65 : vector<2x8xf32> to vector<2x8x1xf32>
    %67 = vector.broadcast %66 : vector<2x8x1xf32> to vector<2x8x64xf32>
    %68 = arith.subf %64, %67 : vector<2x8x64xf32>
    %69 = math.exp %68 : vector<2x8x64xf32>
    %cst_36 = arith.constant dense<0.000000e+00> : vector<2x8xf32>
    %70 = vector.multi_reduction <add>, %69, %cst_36 [2] : vector<2x8x64xf32> to vector<2x8xf32>
    %71 = vector.shape_cast %70 : vector<2x8xf32> to vector<2x8x1xf32>
    %72 = tpu.reciprocal %71 {approx = true} : vector<2x8x1xf32> -> vector<2x8x1xf32>
    %73 = vector.broadcast %72 : vector<2x8x1xf32> to vector<2x8x64xf32>
    %74 = arith.mulf %69, %73 : vector<2x8x64xf32>
    %75 = arith.truncf %74 : vector<2x8x64xf32> to vector<2x8x64xbf16>
    %76 = arith.truncf %61 : vector<2x64x32xf32> to vector<2x64x32xbf16>
    "tpu.trace_start"() <{level = 10 : i32, message = "bls,bsd->bld"}> : () -> ()
    %cst_37 = arith.constant dense<0.000000e+00> : vector<2x8x32xf32>
    %77 = tpu.matmul %75, %76, %cst_37 {dimension_numbers = #tpu.dot_dimension_numbers<[2], [1], [1], [2], [0, 0, 0, 1, 1, 2], [0], [0]>} : vector<2x8x64xbf16>, vector<2x64x32xbf16>, vector<2x8x32xf32> -> vector<2x8x32xf32>
    "tpu.trace_stop"() : () -> ()
    %78 = vector.shape_cast %77 : vector<2x8x32xf32> to vector<16x32xf32>
    %79 = arith.truncf %78 : vector<16x32xf32> to vector<16x32xbf16>
    %c3_38 = arith.constant 3 : index
    %c0_39 = arith.constant 0 : index
    %c0_40 = arith.constant 0 : index
    %80 = vector.load %arg4[%c3_38, %c0_39, %c0_40] : memref<4x32x32xbf16, #tpu.memory_space<vmem>>, vector<1x32x32xbf16>
    %81 = vector.shape_cast %80 : vector<1x32x32xbf16> to vector<32x32xbf16>
    %cst_41 = arith.constant dense<0.000000e+00> : vector<16x32xf32>
    %82 = tpu.matmul %79, %81, %cst_41 {dimension_numbers = #tpu.dot_dimension_numbers<[1], [0], [0], [1], [0, 0, 1, 1], [], []>} : vector<16x32xbf16>, vector<32x32xbf16>, vector<16x32xf32> -> vector<16x32xf32>
    %c6 = arith.constant 6 : index
    %c0_42 = arith.constant 0 : index
    %83 = vector.load %arg5[%c6, %c0_42] : memref<8x32xf32, #tpu.memory_space<vmem>>, vector<1x32xf32>
    %84 = vector.broadcast %83 : vector<1x32xf32> to vector<16x32xf32>
    %85 = arith.addf %82, %84 : vector<16x32xf32>
    %86 = arith.addf %1, %85 : vector<16x32xf32>
    %87 = vector.shape_cast %86 : vector<16x32xf32> to vector<2x8x32xf32>
    %c0_43 = arith.constant 0 : index
    %c0_44 = arith.constant 0 : index
    %c0_45 = arith.constant 0 : index
    %88 = vector.load %arg6[%c0_43, %c0_44, %c0_45] : memref<2x8x32xf32, #tpu.memory_space<vmem>>, vector<2x8x32xf32>
    tpu.vector_store %arg6[%c0_43, %c0_44, %c0_45], %87 {strides = array<i32>} : memref<2x8x32xf32, #tpu.memory_space<vmem>>, vector<2x8x32xf32>,
    return
  }
}

</mosaic_0001>

<llo_original>
// kernel: _forward_impl.1
$region0: #{_forward_impl.1}
  #allocation0 [shape = 'u32[]', space=smem, size = 0x4, offset = 0x4, fixed_abs, tag = 'smem constant byte address 0x4 - core index']
  #allocation1 [shape = 'u32[144,128]{1,0:T(1,128)}', space=vmem, size = 0x12000, scoped, tag = 'internal scratch']
  %s0 = inlined_call_operand.vmem [shape: f32[2,8,32], index: 0, kind: input, shape index: {}]
  %s1 = inlined_call_operand.vmem [shape: bf16[2,4,256], index: 1, kind: input, shape index: {}]
  %s2 = inlined_call_operand.vmem [shape: bf16[256,64], index: 2, kind: input, shape index: {}]
  %s3 = inlined_call_operand.vmem [shape: bf16[4,32], index: 3, kind: input, shape index: {}]
  %s4 = inlined_call_operand.vmem [shape: bf16[4,32,32], index: 4, kind: input, shape index: {}]
  %s5 = inlined_call_operand.vmem [shape: f32[8,32], index: 5, kind: input, shape index: {}]
  %s6 = inlined_call_operand.hbm [shape: f32[2,8,32], index: 6, kind: output, shape index: {}]
  %s7 = sld [smem:[#allocation0]]
  $region34: #{_forward_impl.1} parent=0
    _
  %s9 = ssub.s32 1, %s7
  %s10 = scalar_select 0, %s9, %s7
  $region1: #{_forward_impl.1} parent=0
    #allocation2 [shape = 'u8[8192]{0}', space=vmem, size = 0x2000, scoped, tag = 'output window, operand 0, single buffered']
    #allocation3 [shape = 's32[1]{0}', space=sflag, size = 0x4, scoped, tag = 'scoped memory for _forward_impl.1']
    %11 = vsyncpa [#allocation3], 0
    // Predicated region
    $region2: #{_forward_impl.1} parent=1 // pred_check
      _
    $region3: #{_forward_impl.1} parent=1 // pred_check_branch
      %13 = sbr.rel (0) target = $region5
    $region4: #{_forward_impl.1} parent=1 // pred_region
      _
    $region5: #{_forward_impl.1} parent=1 // pred_fallthru
      _
    // Predicated region
    $region6: #{_forward_impl.1} parent=1 // pred_check
      _
    $region7: #{_forward_impl.1} parent=1 // pred_check_branch
      %15 = sbr.rel (0) target = $region9
    $region8: #{_forward_impl.1} parent=1 // pred_region
      _
    $region9: #{_forward_impl.1} parent=1 // pred_fallthru
      _
    // Predicated region
    $region10: #{_forward_impl.1} parent=1 // pred_check
      _
    $region11: #{_forward_impl.1} parent=1 // pred_check_branch
      %17 = sbr.rel (0) target = $region13
    $region12: #{_forward_impl.1} parent=1 // pred_region
      _
    $region13: #{_forward_impl.1} parent=1 // pred_fallthru
      _
    // Predicated region
    $region14: #{_forward_impl.1} parent=1 // pred_check
      _
    $region15: #{_forward_impl.1} parent=1 // pred_check_branch
      %19 = sbr.rel (0) target = $region17
    $region16: #{_forward_impl.1} parent=1 // pred_region
      _
    $region17: #{_forward_impl.1} parent=1 // pred_fallthru
      _
    // Predicated region
    $region18: #{_forward_impl.1} parent=1 // pred_check
      _
    $region19: #{_forward_impl.1} parent=1 // pred_check_branch
      %21 = sbr.rel (0) target = $region21
    $region20: #{_forward_impl.1} parent=1 // pred_region
      _
    $region21: #{_forward_impl.1} parent=1 // pred_fallthru
      _
    // Predicated region
    $region22: #{_forward_impl.1} parent=1 // pred_check
      _
    $region23: #{_forward_impl.1} parent=1 // pred_check_branch
      %23 = sbr.rel (0) target = $region25
    $region24: #{_forward_impl.1} parent=1 // pred_region
      _
    $region25: #{_forward_impl.1} parent=1 // pred_fallthru
      _
    %v25 = vld [vmem:[%s0] sm:$0xff]
    %v26 = vld [vmem:[%s0 + $0x8] sm:$0xff]
    %v27 = vld [vmem:[%s1] sm:$0xf]
    %v28 = vld [vmem:[%s1 + $0x4] sm:$0xf]
    %v29 = vld [vmem:[%s2] sm:$0xf]
    %v30 = vld [vmem:[%s2 + $0x4] sm:$0xf]
    %v31 = vld [vmem:[%s2 + $0x8] sm:$0xf]
    %v32 = vld [vmem:[%s2 + $0xc] sm:$0xf]
    %v33 = vld [vmem:[%s2 + $0x10] sm:$0xf]
    %v34 = vld [vmem:[%s2 + $0x14] sm:$0xf]
    %v35 = vld [vmem:[%s2 + $0x18] sm:$0xf]
    %v36 = vld [vmem:[%s2 + $0x1c] sm:$0xf]
    %v37 = vld [vmem:[%s2 + $0x20] sm:$0xf]
    %v38 = vld [vmem:[%s2 + $0x24] sm:$0xf]
    %v39 = vld [vmem:[%s2 + $0x28] sm:$0xf]
    %v40 = vld [vmem:[%s2 + $0x2c] sm:$0xf]
    %v41 = vld [vmem:[%s2 + $0x30] sm:$0xf]
    %v42 = vld [vmem:[%s2 + $0x34] sm:$0xf]
    %v43 = vld [vmem:[%s2 + $0x38] sm:$0xf]
    %v44 = vld [vmem:[%s2 + $0x3c] sm:$0xf]
    %v45 = vld [vmem:[%s2 + $0x40] sm:$0xf]
    %v46 = vld [vmem:[%s2 + $0x44] sm:$0xf]
    %v47 = vld [vmem:[%s2 + $0x48] sm:$0xf]
    %v48 = vld [vmem:[%s2 + $0x4c] sm:$0xf]
    %v49 = vld [vmem:[%s2 + $0x50] sm:$0xf]
    %v50 = vld [vmem:[%s2 + $0x54] sm:$0xf]
    %v51 = vld [vmem:[%s2 + $0x58] sm:$0xf]
    %v52 = vld [vmem:[%s2 + $0x5c] sm:$0xf]
    %v53 = vld [vmem:[%s2 + $0x60] sm:$0xf]
    %v54 = vld [vmem:[%s2 + $0x64] sm:$0xf]
    %v55 = vld [vmem:[%s2 + $0x68] sm:$0xf]
    %v56 = vld [vmem:[%s2 + $0x6c] sm:$0xf]
    %v57 = vld [vmem:[%s2 + $0x70] sm:$0xf]
    %v58 = vld [vmem:[%s2 + $0x74] sm:$0xf]
    %v59 = vld [vmem:[%s2 + $0x78] sm:$0xf]
    %v60 = vld [vmem:[%s2 + $0x7c] sm:$0xf]
    %v63 = vcombine.low %v27, %v28
    %v65 = vunpack.c.l.s4 1983009808
    %v66 = vunpack.c.0.s8 %v65
    %v67 = vlaneseq
    %v68 = vshrl.u32 %v67, 7
    %v69 = vsub.s32 %v66, %v68
    %v70 = vrot.slane %v63, %v69
    %v71 = vcombine.high %v70, %v70
    %v106 = vunpack.c.l.b16 %v29
    %v107 = vunpack.c.l.b16 %v30
    %v108 = vunpack.c.l.b16 %v31
    %v109 = vunpack.c.l.b16 %v32
    %v110 = vunpack.c.l.b16 %v33
    %v111 = vunpack.c.l.b16 %v34
    %v112 = vunpack.c.l.b16 %v35
    %v113 = vunpack.c.l.b16 %v36
    %v114 = vunpack.c.l.b16 %v37
    %v115 = vunpack.c.l.b16 %v38
    %v116 = vunpack.c.l.b16 %v39
    %v117 = vunpack.c.l.b16 %v40
    %v118 = vunpack.c.l.b16 %v41
    %v119 = vunpack.c.l.b16 %v42
    %v120 = vunpack.c.l.b16 %v43
    %v121 = vunpack.c.l.b16 %v44
    %v122 = vunpack.c.l.b16 %v45
    %v123 = vunpack.c.l.b16 %v46
    %v124 = vunpack.c.l.b16 %v47
    %v125 = vunpack.c.l.b16 %v48
    %v126 = vunpack.c.l.b16 %v49
    %v127 = vunpack.c.l.b16 %v50
    %v128 = vunpack.c.l.b16 %v51
    %v129 = vunpack.c.l.b16 %v52
    %v130 = vunpack.c.l.b16 %v53
    %v131 = vunpack.c.l.b16 %v54
    %v132 = vunpack.c.l.b16 %v55
    %v133 = vunpack.c.l.b16 %v56
    %v134 = vunpack.c.l.b16 %v57
    %v135 = vunpack.c.l.b16 %v58
    %v136 = vunpack.c.l.b16 %v59
    %v137 = vunpack.c.l.b16 %v60
    %v138 = vpack.c.b16 %v107, %v106
    %v139 = vpack.c.b16 %v109, %v108
    %v140 = vpack.c.b16 %v111, %v110
    %v141 = vpack.c.b16 %v113, %v112
    %v142 = vpack.c.b16 %v115, %v114
    %v143 = vpack.c.b16 %v117, %v116
    %v144 = vpack.c.b16 %v119, %v118
    %v145 = vpack.c.b16 %v121, %v120
    %v146 = vpack.c.b16 %v123, %v122
    %v147 = vpack.c.b16 %v125, %v124
    %v148 = vpack.c.b16 %v127, %v126
    %v149 = vpack.c.b16 %v129, %v128
    %v150 = vpack.c.b16 %v131, %v130
    %v151 = vpack.c.b16 %v133, %v132
    %v152 = vpack.c.b16 %v135, %v134
    %v153 = vpack.c.b16 %v137, %v136
    %170 = vmatprep.subr.bf16.mxu0 0
    %171 = vmatpush1.bf16.msra.mxu0 %v138
    %172 = vmatprep.subr.bf16.mxu0 0
    %173 = vmatpush1.bf16.msra.mxu0 %v139
    %174 = vmatprep.subr.bf16.mxu0 0
    %175 = vmatpush1.bf16.msra.mxu0 %v140
    %176 = vmatprep.subr.bf16.mxu0 0
    %177 = vmatpush1.bf16.msra.mxu0 %v141
    %178 = vmatprep.subr.bf16.mxu0 0
    %179 = vmatpush1.bf16.msra.mxu0 %v142
    %180 = vmatprep.subr.bf16.mxu0 0
    %181 = vmatpush1.bf16.msra.mxu0 %v143
    %182 = vmatprep.subr.bf16.mxu0 0
    %183 = vmatpush1.bf16.msra.mxu0 %v144
    %184 = vmatprep.subr.bf16.mxu0 0
    %185 = vmatpush1.bf16.msra.mxu0 %v145
    %186 = vmatprep.subr.bf16.mxu0 0
    %187 = vmatpush1.bf16.msra.mxu0 %v146
    %188 = vmatprep.subr.bf16.mxu0 0
    %189 = vmatpush1.bf16.msra.mxu0 %v147
    %190 = vmatprep.subr.bf16.mxu0 0
    %191 = vmatpush1.bf16.msra.mxu0 %v148
    %192 = vmatprep.subr.bf16.mxu0 0
    %193 = vmatpush1.bf16.msra.mxu0 %v149
    %194 = vmatprep.subr.bf16.mxu0 0
    %195 = vmatpush1.bf16.msra.mxu0 %v150
    %196 = vmatprep.subr.bf16.mxu0 0
    %197 = vmatpush1.bf16.msra.mxu0 %v151
    %198 = vmatprep.subr.bf16.mxu0 0
    %199 = vmatpush1.bf16.msra.mxu0 %v152
    %200 = vmatprep.subr.bf16.mxu0 0
    %201 = vmatpush1.bf16.msra.mxu0 %v153
    %202 = vmatprep.mubr.bf16.mxu0 %v71
    %203 = vmatmul.mubr.bf16.gmra.mrb[0].mxu0 %v70
    %v204 = vpop.f32.mrb[0].mxu0
    %v205 = vadd.f32 0.0, %v204
    %v206 = vpop.f32.mrb[0].mxu0
    %v207 = vpop.f32.mrb[0].mxu0
    %v208 = vpop.f32.mrb[0].mxu0
    %209 = vdwg.mxu0
    %v211 = vcombine.high %v205, %v205
    %213 = vxpose.xlu0.b32.start [1/16] %v205, 128
    %214 = vxpose.xlu0.b32.cont [2/16] 0.0, 128
    %215 = vxpose.xlu0.b32.cont [3/16] 0.0, 128
    %216 = vxpose.xlu0.b32.cont [4/16] 0.0, 128
    %217 = vxpose.xlu0.b32.cont [5/16] 0.0, 128
    %218 = vxpose.xlu0.b32.cont [6/16] 0.0, 128
    %219 = vxpose.xlu0.b32.cont [7/16] 0.0, 128
    %220 = vxpose.xlu0.b32.cont [8/16] 0.0, 128
    %221 = vxpose.xlu0.b32.cont [9/16] 0.0, 128
    %222 = vxpose.xlu0.b32.cont [10/16] 0.0, 128
    %223 = vxpose.xlu0.b32.cont [11/16] 0.0, 128
    %224 = vxpose.xlu0.b32.cont [12/16] 0.0, 128
    %225 = vxpose.xlu0.b32.cont [13/16] 0.0, 128
    %226 = vxpose.xlu0.b32.cont [14/16] 0.0, 128
    %227 = vxpose.xlu0.b32.cont [15/16] 0.0, 128
    %228 = vxpose.xlu0.b32.end [16/16] 0.0, 128
    %v229 = vpop.trf.xlu0
    %v230 = vpop.trf.xlu0
    %v231 = vpop.trf.xlu0
    %v232 = vpop.trf.xlu0
    %v233 = vpop.trf.xlu0
    %v234 = vpop.trf.xlu0
    %v235 = vpop.trf.xlu0
    %v236 = vpop.trf.xlu0
    %v237 = vpop.trf.xlu0
    %v238 = vpop.trf.xlu0
    %v239 = vpop.trf.xlu0
    %v240 = vpop.trf.xlu0
    %v241 = vpop.trf.xlu0
    %v242 = vpop.trf.xlu0
    %v243 = vpop.trf.xlu0
    %v244 = vpop.trf.xlu0
    %245 = vxpose.xlu0.b32.start [1/16] %v211, 128
    %246 = vxpose.xlu0.b32.cont [2/16] 0.0, 128
    %247 = vxpose.xlu0.b32.cont [3/16] 0.0, 128
    %248 = vxpose.xlu0.b32.cont [4/16] 0.0, 128
    %249 = vxpose.xlu0.b32.cont [5/16] 0.0, 128
    %250 = vxpose.xlu0.b32.cont [6/16] 0.0, 128
    %251 = vxpose.xlu0.b32.cont [7/16] 0.0, 128
    %252 = vxpose.xlu0.b32.cont [8/16] 0.0, 128
    %253 = vxpose.xlu0.b32.cont [9/16] 0.0, 128
    %254 = vxpose.xlu0.b32.cont [10/16] 0.0, 128
    %255 = vxpose.xlu0.b32.cont [11/16] 0.0, 128
    %256 = vxpose.xlu0.b32.cont [12/16] 0.0, 128
    %257 = vxpose.xlu0.b32.cont [13/16] 0.0, 128
    %258 = vxpose.xlu0.b32.cont [14/16] 0.0, 128
    %259 = vxpose.xlu0.b32.cont [15/16] 0.0, 128
    %260 = vxpose.xlu0.b32.end [16/16] 0.0, 128
    %v261 = vpop.trf.xlu0
    %v262 = vpop.trf.xlu0
    %v263 = vpop.trf.xlu0
    %v264 = vpop.trf.xlu0
    %v265 = vpop.trf.xlu0
    %v266 = vpop.trf.xlu0
    %v267 = vpop.trf.xlu0
    %v268 = vpop.trf.xlu0
    %v269 = vpop.trf.xlu0
    %v270 = vpop.trf.xlu0
    %v271 = vpop.trf.xlu0
    %v272 = vpop.trf.xlu0
    %v273 = vpop.trf.xlu0
    %v274 = vpop.trf.xlu0
    %v275 = vpop.trf.xlu0
    %v276 = vpop.trf.xlu0
    %v277 = vpack.c.bf16 %v230, %v229
    %v278 = vpack.c.bf16 %v232, %v231
    %v279 = vpack.c.bf16 %v234, %v233
    %v280 = vpack.c.bf16 %v236, %v235
    %v281 = vpack.c.bf16 %v262, %v261
    %v282 = vpack.c.bf16 %v264, %v263
    %v283 = vpack.c.bf16 %v266, %v265
    %v284 = vpack.c.bf16 %v268, %v267
    %v285 = vld [vmem:[%s3] sm:$0x3]
    %v286 = vld [vmem:[%s5] sm:$0x1]
    %v287 = vlaneseq
    %v288 = vshrl.u32 %v287, 7
    %v289 = vsub.s32 0, %v288
    %v290 = vrot.slane %v286, %v289
    %vm291 = vcmask 31744
    %v293 = vsel %vm291, %v277, 0
    %v296 = vsel %vm291, %v278, 0
    %v299 = vsel %vm291, %v279, 0
    %v302 = vsel %vm291, %v280, 0
    %v305 = vsel %vm291, %v281, 0
    %v308 = vsel %vm291, %v282, 0
    %v311 = vsel %vm291, %v283, 0
    %v314 = vsel %vm291, %v284, 0
    %vm316 = vcmask 1041408
    %v318 = vsel %vm316, %v285, 0
    %320 = vmatprep.subr.bf16.mxu0 0
    %321 = vmatpush1.bf16.msra.mxu0 %v318
    %322 = vmatprep.subr.bf16.mxu0 0
    %323 = vmatpush1.bf16.msra.mxu0 0
    %324 = vmatprep.subr.bf16.mxu0 0
    %325 = vmatpush1.bf16.msra.mxu0 0
    %326 = vmatprep.subr.bf16.mxu0 0
    %327 = vmatpush1.bf16.msra.mxu0 0
    %328 = vmatprep.subr.bf16.mxu0 0
    %329 = vmatpush1.bf16.msra.mxu0 0
    %330 = vmatprep.subr.bf16.mxu0 0
    %331 = vmatpush1.bf16.msra.mxu0 0
    %332 = vmatprep.subr.bf16.mxu0 0
    %333 = vmatpush1.bf16.msra.mxu0 0
    %334 = vmatprep.subr.bf16.mxu0 0
    %335 = vmatpush1.bf16.msra.mxu0 0
    %336 = vmatprep.subr.bf16.mxu0 0
    %337 = vmatpush1.bf16.msra.mxu0 0
    %338 = vmatprep.subr.bf16.mxu0 0
    %339 = vmatpush1.bf16.msra.mxu0 0
    %340 = vmatprep.subr.bf16.mxu0 0
    %341 = vmatpush1.bf16.msra.mxu0 0
    %342 = vmatprep.subr.bf16.mxu0 0
    %343 = vmatpush1.bf16.msra.mxu0 0
    %344 = vmatprep.subr.bf16.mxu0 0
    %345 = vmatpush1.bf16.msra.mxu0 0
    %346 = vmatprep.subr.bf16.mxu0 0
    %347 = vmatpush1.bf16.msra.mxu0 0
    %348 = vmatprep.subr.bf16.mxu0 0
    %349 = vmatpush1.bf16.msra.mxu0 0
    %350 = vmatprep.subr.bf16.mxu0 0
    %351 = vmatpush1.bf16.msra.mxu0 0
    %352 = vmatprep.mubr.bf16.mxu0 0
    %353 = vmatmul.mubr.bf16.gmra.mrb[0].mxu0 %v293
    %v354 = vpop.f32.mrb[0].mxu0
    %v355 = vadd.f32 %v290, %v354
    %v356 = vpop.f32.mrb[0].mxu0
    %v357 = vpop.f32.mrb[0].mxu0
    %v358 = vadd.f32 %v290, %v357
    %v359 = vpop.f32.mrb[0].mxu0
    %360 = vmatprep.mubr.bf16.mxu0 0
    %361 = vmatmul.mubr.bf16.gmra.mrb[0].mxu0 %v296
    %v362 = vpop.f32.mrb[0].mxu0
    %v363 = vadd.f32 %v290, %v362
    %v364 = vpop.f32.mrb[0].mxu0
    %v365 = vpop.f32.mrb[0].mxu0
    %v366 = vadd.f32 %v290, %v365
    %v367 = vpop.f32.mrb[0].mxu0
    %368 = vmatprep.mubr.bf16.mxu0 0
    %369 = vmatmul.mubr.bf16.gmra.mrb[0].mxu0 %v299
    %v370 = vpop.f32.mrb[0].mxu0
    %v371 = vadd.f32 %v290, %v370
    %v372 = vpop.f32.mrb[0].mxu0
    %v373 = vpop.f32.mrb[0].mxu0
    %v374 = vadd.f32 %v290, %v373
    %v375 = vpop.f32.mrb[0].mxu0
    %376 = vmatprep.mubr.bf16.mxu0 0
    %377 = vmatmul.mubr.bf16.gmra.mrb[0].mxu0 %v302
    %v378 = vpop.f32.mrb[0].mxu0
    %v379 = vadd.f32 %v290, %v378
    %v380 = vpop.f32.mrb[0].mxu0
    %v381 = vpop.f32.mrb[0].mxu0
    %v382 = vadd.f32 %v290, %v381
    %v383 = vpop.f32.mrb[0].mxu0
    %384 = vmatprep.mubr.bf16.mxu0 0
    %385 = vmatmul.mubr.bf16.gmra.mrb[0].mxu0 %v305
    %v386 = vpop.f32.mrb[0].mxu0
    %v387 = vadd.f32 %v290, %v386
    %v388 = vpop.f32.mrb[0].mxu0
    %v389 = vpop.f32.mrb[0].mxu0
    %v390 = vadd.f32 %v290, %v389
    %v391 = vpop.f32.mrb[0].mxu0
    %392 = vmatprep.mubr.bf16.mxu0 0
    %393 = vmatmul.mubr.bf16.gmra.mrb[0].mxu0 %v308
    %v394 = vpop.f32.mrb[0].mxu0
    %v395 = vadd.f32 %v290, %v394
    %v396 = vpop.f32.mrb[0].mxu0
    %v397 = vpop.f32.mrb[0].mxu0
    %v398 = vadd.f32 %v290, %v397
    %v399 = vpop.f32.mrb[0].mxu0
    %400 = vmatprep.mubr.bf16.mxu0 0
    %401 = vmatmul.mubr.bf16.gmra.mrb[0].mxu0 %v311
    %v402 = vpop.f32.mrb[0].mxu0
    %v403 = vadd.f32 %v290, %v402
    %v404 = vpop.f32.mrb[0].mxu0
    %v405 = vpop.f32.mrb[0].mxu0
    %v406 = vadd.f32 %v290, %v405
    %v407 = vpop.f32.mrb[0].mxu0
    %408 = vmatprep.mubr.bf16.mxu0 0
    %409 = vmatmul.mubr.bf16.gmra.mrb[0].mxu0 %v314
    %v410 = vpop.f32.mrb[0].mxu0
    %v411 = vadd.f32 %v290, %v410
    %v412 = vpop.f32.mrb[0].mxu0
    %v413 = vpop.f32.mrb[0].mxu0
    %v414 = vadd.f32 %v290, %v413
    %v415 = vpop.f32.mrb[0].mxu0
    %416 = vdwg.mxu0
    %vm417 = vcmask 261120
    %v418 = vsel %vm417, %v355, 0.0
    %419 = vadd.xlane.f32.xlu0 %v418
    %v420 = vpop.xlane.xlu0 %419
    %v421 = vsel %vm417, %v358, 0.0
    %422 = vadd.xlane.f32.xlu0 %v421
    %v423 = vpop.xlane.xlu0 %422
    %v424 = vsel %vm417, %v363, 0.0
    %425 = vadd.xlane.f32.xlu0 %v424
    %v426 = vpop.xlane.xlu0 %425
    %v427 = vsel %vm417, %v366, 0.0
    %428 = vadd.xlane.f32.xlu0 %v427
    %v429 = vpop.xlane.xlu0 %428
    %v430 = vsel %vm417, %v371, 0.0
    %431 = vadd.xlane.f32.xlu0 %v430
    %v432 = vpop.xlane.xlu0 %431
    %v433 = vsel %vm417, %v374, 0.0
    %434 = vadd.xlane.f32.xlu0 %v433
    %v435 = vpop.xlane.xlu0 %434
    %v436 = vsel %vm417, %v379, 0.0
    %437 = vadd.xlane.f32.xlu0 %v436
    %v438 = vpop.xlane.xlu0 %437
    %v439 = vsel %vm417, %v382, 0.0
    %440 = vadd.xlane.f32.xlu0 %v439
    %v441 = vpop.xlane.xlu0 %440
    %v442 = vsel %vm417, %v387, 0.0
    %443 = vadd.xlane.f32.xlu0 %v442
    %v444 = vpop.xlane.xlu0 %443
    %v445 = vsel %vm417, %v390, 0.0
    %446 = vadd.xlane.f32.xlu0 %v445
    %v447 = vpop.xlane.xlu0 %446
    %v448 = vsel %vm417, %v395, 0.0
    %449 = vadd.xlane.f32.xlu0 %v448
    %v450 = vpop.xlane.xlu0 %449
    %v451 = vsel %vm417, %v398, 0.0
    %452 = vadd.xlane.f32.xlu0 %v451
    %v453 = vpop.xlane.xlu0 %452
    %v454 = vsel %vm417, %v403, 0.0
    %455 = vadd.xlane.f32.xlu0 %v454
    %v456 = vpop.xlane.xlu0 %455
    %v457 = vsel %vm417, %v406, 0.0
    %458 = vadd.xlane.f32.xlu0 %v457
    %v459 = vpop.xlane.xlu0 %458
    %v460 = vsel %vm417, %v411, 0.0
    %461 = vadd.xlane.f32.xlu0 %v460
    %v462 = vpop.xlane.xlu0 %461
    %v463 = vsel %vm417, %v414, 0.0
    %464 = vadd.xlane.f32.xlu0 %v463
    %v465 = vpop.xlane.xlu0 %464
    %v466 = vrcp.pop 32.0
    %v467 = vmul.f32 %v420, %v466
    %v468 = vmul.f32 %v423, %v466
    %v469 = vmul.f32 %v426, %v466
    %v470 = vmul.f32 %v429, %v466
    %v471 = vmul.f32 %v432, %v466
    %v472 = vmul.f32 %v435, %v466
    %v473 = vmul.f32 %v438, %v466
    %v474 = vmul.f32 %v441, %v466
    %v475 = vmul.f32 %v444, %v466
    %v476 = vmul.f32 %v447, %v466
    %v477 = vmul.f32 %v450, %v466
    %v478 = vmul.f32 %v453, %v466
    %v479 = vmul.f32 %v456, %v466
    %v480 = vmul.f32 %v459, %v466
    %v481 = vmul.f32 %v462, %v466
    %v482 = vmul.f32 %v465, %v466
    %v483 = vsub.f32 %v355, %v467
    %v484 = vsub.f32 %v358, %v468
    %v485 = vsub.f32 %v363, %v469
    %v486 = vsub.f32 %v366, %v470
    %v487 = vsub.f32 %v371, %v471
    %v488 = vsub.f32 %v374, %v472
    %v489 = vsub.f32 %v379, %v473
    %v490 = vsub.f32 %v382, %v474
    %v491 = vsub.f32 %v387, %v475
    %v492 = vsub.f32 %v390, %v476
    %v493 = vsub.f32 %v395, %v477
    %v494 = vsub.f32 %v398, %v478
    %v495 = vsub.f32 %v403, %v479
    %v496 = vsub.f32 %v406, %v480
    %v497 = vsub.f32 %v411, %v481
    %v498 = vsub.f32 %v414, %v482
    %v499 = vmul.f32 %v483, %v483
    %v500 = vmul.f32 %v484, %v484
    %v501 = vmul.f32 %v485, %v485
    %v502 = vmul.f32 %v486, %v486
    %v503 = vmul.f32 %v487, %v487
    %v504 = vmul.f32 %v488, %v488
    %v505 = vmul.f32 %v489, %v489
    %v506 = vmul.f32 %v490, %v490
    %v507 = vmul.f32 %v491, %v491
    %v508 = vmul.f32 %v492, %v492
    %v509 = vmul.f32 %v493, %v493
    %v510 = vmul.f32 %v494, %v494
    %v511 = vmul.f32 %v495, %v495
    %v512 = vmul.f32 %v496, %v496
    %v513 = vmul.f32 %v497, %v497
    %v514 = vmul.f32 %v498, %v498
    %v515 = vsel %vm417, %v499, 0.0
    %516 = vadd.xlane.f32.xlu0 %v515
    %v517 = vpop.xlane.xlu0 %516
    %v518 = vsel %vm417, %v500, 0.0
    %519 = vadd.xlane.f32.xlu0 %v518
    %v520 = vpop.xlane.xlu0 %519
    %v521 = vsel %vm417, %v501, 0.0
    %522 = vadd.xlane.f32.xlu0 %v521
    %v523 = vpop.xlane.xlu0 %522
    %v524 = vsel %vm417, %v502, 0.0
    %525 = vadd.xlane.f32.xlu0 %v524
    %v526 = vpop.xlane.xlu0 %525
    %v527 = vsel %vm417, %v503, 0.0
    %528 = vadd.xlane.f32.xlu0 %v527
    %v529 = vpop.xlane.xlu0 %528
    %v530 = vsel %vm417, %v504, 0.0
    %531 = vadd.xlane.f32.xlu0 %v530
    %v532 = vpop.xlane.xlu0 %531
    %v533 = vsel %vm417, %v505, 0.0
    %534 = vadd.xlane.f32.xlu0 %v533
    %v535 = vpop.xlane.xlu0 %534
    %v536 = vsel %vm417, %v506, 0.0
    %537 = vadd.xlane.f32.xlu0 %v536
    %v538 = vpop.xlane.xlu0 %537
    %v539 = vsel %vm417, %v507, 0.0
    %540 = vadd.xlane.f32.xlu0 %v539
    %v541 = vpop.xlane.xlu0 %540
    %v542 = vsel %vm417, %v508, 0.0
    %543 = vadd.xlane.f32.xlu0 %v542
    %v544 = vpop.xlane.xlu0 %543
    %v545 = vsel %vm417, %v509, 0.0
    %546 = vadd.xlane.f32.xlu0 %v545
    %v547 = vpop.xlane.xlu0 %546
    %v548 = vsel %vm417, %v510, 0.0
    %549 = vadd.xlane.f32.xlu0 %v548
    %v550 = vpop.xlane.xlu0 %549
    %v551 = vsel %vm417, %v511, 0.0
    %552 = vadd.xlane.f32.xlu0 %v551
    %v553 = vpop.xlane.xlu0 %552
    %v554 = vsel %vm417, %v512, 0.0
    %555 = vadd.xlane.f32.xlu0 %v554
    %v556 = vpop.xlane.xlu0 %555
    %v557 = vsel %vm417, %v513, 0.0
    %558 = vadd.xlane.f32.xlu0 %v557
    %v559 = vpop.xlane.xlu0 %558
    %v560 = vsel %vm417, %v514, 0.0
    %561 = vadd.xlane.f32.xlu0 %v560
    %v562 = vpop.xlane.xlu0 %561
    %v563 = vmul.f32 %v517, %v466
    %v564 = vmul.f32 %v520, %v466
    %v565 = vmul.f32 %v523, %v466
    %v566 = vmul.f32 %v526, %v466
    %v567 = vmul.f32 %v529, %v466
    %v568 = vmul.f32 %v532, %v466
    %v569 = vmul.f32 %v535, %v466
    %v570 = vmul.f32 %v538, %v466
    %v571 = vmul.f32 %v541, %v466
    %v572 = vmul.f32 %v544, %v466
    %v573 = vmul.f32 %v547, %v466
    %v574 = vmul.f32 %v550, %v466
    %v575 = vmul.f32 %v553, %v466
    %v576 = vmul.f32 %v556, %v466
    %v577 = vmul.f32 %v559, %v466
    %v578 = vmul.f32 %v562, %v466
    %v579 = vadd.f32 %v563, 1e-05
    %v580 = vadd.f32 %v564, 1e-05
    %v581 = vadd.f32 %v565, 1e-05
    %v582 = vadd.f32 %v566, 1e-05
    %v583 = vadd.f32 %v567, 1e-05
    %v584 = vadd.f32 %v568, 1e-05
    %v585 = vadd.f32 %v569, 1e-05
    %v586 = vadd.f32 %v570, 1e-05
    %v587 = vadd.f32 %v571, 1e-05
    %v588 = vadd.f32 %v572, 1e-05
    %v589 = vadd.f32 %v573, 1e-05
    %v590 = vadd.f32 %v574, 1e-05
    %v591 = vadd.f32 %v575, 1e-05
    %v592 = vadd.f32 %v576, 1e-05
    %v593 = vadd.f32 %v577, 1e-05
    %v594 = vadd.f32 %v578, 1e-05
    %v595 = vrsqrt.pop %v579
    %v596 = vrsqrt.pop %v580
    %v597 = vrsqrt.pop %v581
    %v598 = vrsqrt.pop %v582
    %v599 = vrsqrt.pop %v583
    %v600 = vrsqrt.pop %v584
    %v601 = vrsqrt.pop %v585
    %v602 = vrsqrt.pop %v586
    %v603 = vrsqrt.pop %v587
    %v604 = vrsqrt.pop %v588
    %v605 = vrsqrt.pop %v589
    %v606 = vrsqrt.pop %v590
    %v607 = vrsqrt.pop %v591
    %v608 = vrsqrt.pop %v592
    %v609 = vrsqrt.pop %v593
    %v610 = vrsqrt.pop %v594
    %v611 = vmul.f32 %v483, %v595
    %v612 = vmul.f32 %v484, %v596
    %v613 = vmul.f32 %v485, %v597
    %v614 = vmul.f32 %v486, %v598
    %v615 = vmul.f32 %v487, %v599
    %v616 = vmul.f32 %v488, %v600
    %v617 = vmul.f32 %v489, %v601
    %v618 = vmul.f32 %v490, %v602
    %v619 = vmul.f32 %v491, %v603
    %v620 = vmul.f32 %v492, %v604
    %v621 = vmul.f32 %v493, %v605
    %v622 = vmul.f32 %v494, %v606
    %v623 = vmul.f32 %v495, %v607
    %v624 = vmul.f32 %v496, %v608
    %v625 = vmul.f32 %v497, %v609
    %v626 = vmul.f32 %v498, %v610
    %v627 = vld [vmem:[%s5 + $0x1] sm:$0x1]
    %v628 = vlaneseq
    %v629 = vshrl.u32 %v628, 7
    %v630 = vsub.s32 0, %v629
    %v631 = vrot.slane %v627, %v630
    %v632 = vmul.f32 %v611, %v631
    %v633 = vmul.f32 %v612, %v631
    %v634 = vmul.f32 %v613, %v631
    %v635 = vmul.f32 %v614, %v631
    %v636 = vmul.f32 %v615, %v631
    %v637 = vmul.f32 %v616, %v631
    %v638 = vmul.f32 %v617, %v631
    %v639 = vmul.f32 %v618, %v631
    %v640 = vmul.f32 %v619, %v631
    %v641 = vmul.f32 %v620, %v631
    %v642 = vmul.f32 %v621, %v631
    %v643 = vmul.f32 %v622, %v631
    %v644 = vmul.f32 %v623, %v631
    %v645 = vmul.f32 %v624, %v631
    %v646 = vmul.f32 %v625, %v631
    %v647 = vmul.f32 %v626, %v631
    %v648 = vld [vmem:[%s5 + $0x2] sm:$0x1]
    %v649 = vlaneseq
    %v650 = vshrl.u32 %v649, 7
    %v651 = vsub.s32 0, %v650
    %v652 = vrot.slane %v648, %v651
    %v653 = vadd.f32 %v632, %v652
    %v654 = vadd.f32 %v633, %v652
    %v655 = vadd.f32 %v634, %v652
    %v656 = vadd.f32 %v635, %v652
    %v657 = vadd.f32 %v636, %v652
    %v658 = vadd.f32 %v637, %v652
    %v659 = vadd.f32 %v638, %v652
    %v660 = vadd.f32 %v639, %v652
    %v661 = vadd.f32 %v640, %v652
    %v662 = vadd.f32 %v641, %v652
    %v663 = vadd.f32 %v642, %v652
    %v664 = vadd.f32 %v643, %v652
    %v665 = vadd.f32 %v644, %v652
    %v666 = vadd.f32 %v645, %v652
    %v667 = vadd.f32 %v646, %v652
    %v668 = vadd.f32 %v647, %v652
    %v669 = vpack.c.bf16 %v654, %v653
    %v670 = vpack.c.bf16 %v656, %v655
    %v671 = vpack.c.bf16 %v658, %v657
    %v672 = vpack.c.bf16 %v660, %v659
    %v673 = vpack.c.bf16 %v662, %v661
    %v674 = vpack.c.bf16 %v664, %v663
    %v675 = vpack.c.bf16 %v666, %v665
    %v676 = vpack.c.bf16 %v668, %v667
    %v677 = vpack.c.bf16 %v26, %v25
    %v678 = vld [vmem:[%s4] sm:$0xf]
    %v679 = vld [vmem:[%s4 + $0x4] sm:$0xf]
    %v680 = vld [vmem:[%s4 + $0x8] sm:$0xf]
    %v681 = vld [vmem:[%s4 + $0xc] sm:$0xf]
    %v682 = vld [vmem:[%s5 + $0x3] sm:$0x1]
    %v683 = vlaneseq
    %v684 = vshrl.u32 %v683, 7
    %v685 = vsub.s32 0, %v684
    %v686 = vrot.slane %v682, %v685
    %v691 = vunpack.c.l.b16 %v678
    %v692 = vunpack.c.l.b16 %v679
    %v693 = vunpack.c.l.b16 %v680
    %v694 = vunpack.c.l.b16 %v681
    %v695 = vpack.c.b16 %v692, %v691
    %v696 = vpack.c.b16 %v694, %v693
    %v700 = vsel %vm417, %v677, 0
    %702 = vmatprep.subr.bf16.mxu0 0
    %703 = vmatpush1.bf16.msra.mxu0 %v695
    %704 = vmatprep.subr.bf16.mxu0 0
    %705 = vmatpush1.bf16.msra.mxu0 %v696
    %706 = vmatprep.subr.bf16.mxu0 0
    %707 = vmatpush1.bf16.msra.mxu0 0
    %708 = vmatprep.subr.bf16.mxu0 0
    %709 = vmatpush1.bf16.msra.mxu0 0
    %710 = vmatprep.subr.bf16.mxu0 0
    %711 = vmatpush1.bf16.msra.mxu0 0
    %712 = vmatprep.subr.bf16.mxu0 0
    %713 = vmatpush1.bf16.msra.mxu0 0
    %714 = vmatprep.subr.bf16.mxu0 0
    %715 = vmatpush1.bf16.msra.mxu0 0
    %716 = vmatprep.subr.bf16.mxu0 0
    %717 = vmatpush1.bf16.msra.mxu0 0
    %718 = vmatprep.subr.bf16.mxu0 0
    %719 = vmatpush1.bf16.msra.mxu0 0
    %720 = vmatprep.subr.bf16.mxu0 0
    %721 = vmatpush1.bf16.msra.mxu0 0
    %722 = vmatprep.subr.bf16.mxu0 0
    %723 = vmatpush1.bf16.msra.mxu0 0
    %724 = vmatprep.subr.bf16.mxu0 0
    %725 = vmatpush1.bf16.msra.mxu0 0
    %726 = vmatprep.subr.bf16.mxu0 0
    %727 = vmatpush1.bf16.msra.mxu0 0
    %728 = vmatprep.subr.bf16.mxu0 0
    %729 = vmatpush1.bf16.msra.mxu0 0
    %730 = vmatprep.subr.bf16.mxu0 0
    %731 = vmatpush1.bf16.msra.mxu0 0
    %732 = vmatprep.subr.bf16.mxu0 0
    %733 = vmatpush1.bf16.msra.mxu0 0
    %734 = vmatprep.mubr.bf16.mxu0 0
    %735 = vmatmul.mubr.bf16.gmra.mrb[0].mxu0 %v700
    %v736 = vpop.f32.mrb[0].mxu0
    %v737 = vadd.f32 %v686, %v736
    %v738 = vpop.f32.mrb[0].mxu0
    %v739 = vpop.f32.mrb[0].mxu0
    %v740 = vadd.f32 %v686, %v739
    %v741 = vpop.f32.mrb[0].mxu0
    %742 = vdwg.mxu0
    %s743 = scalar_lea.vmem %s4, 16
    %v744 = vld [vmem:[%s743] sm:$0xf]
    %v745 = vld [vmem:[%s743 + $0x4] sm:$0xf]
    %v746 = vld [vmem:[%s743 + $0x8] sm:$0xf]
    %v747 = vld [vmem:[%s743 + $0xc] sm:$0xf]
    %v748 = vld [vmem:[%s5 + $0x4] sm:$0x1]
    %v749 = vlaneseq
    %v750 = vshrl.u32 %v749, 7
    %v751 = vsub.s32 0, %v750
    %v752 = vrot.slane %v748, %v751
    %v757 = vunpack.c.l.b16 %v744
    %v758 = vunpack.c.l.b16 %v745
    %v759 = vunpack.c.l.b16 %v746
    %v760 = vunpack.c.l.b16 %v747
    %v761 = vpack.c.b16 %v758, %v757
    %v762 = vpack.c.b16 %v760, %v759
    %v766 = vsel %vm417, %v669, 0
    %v769 = vsel %vm417, %v670, 0
    %v772 = vsel %vm417, %v671, 0
    %v775 = vsel %vm417, %v672, 0
    %v778 = vsel %vm417, %v673, 0
    %v781 = vsel %vm417, %v674, 0
    %v784 = vsel %vm417, %v675, 0
    %v787 = vsel %vm417, %v676, 0
    %789 = vmatprep.subr.bf16.mxu0 0
    %790 = vmatpush1.bf16.msra.mxu0 %v761
    %791 = vmatprep.subr.bf16.mxu0 0
    %792 = vmatpush1.bf16.msra.mxu0 %v762
    %793 = vmatprep.subr.bf16.mxu0 0
    %794 = vmatpush1.bf16.msra.mxu0 0
    %795 = vmatprep.subr.bf16.mxu0 0
    %796 = vmatpush1.bf16.msra.mxu0 0
    %797 = vmatprep.subr.bf16.mxu0 0
    %798 = vmatpush1.bf16.msra.mxu0 0
    %799 = vmatprep.subr.bf16.mxu0 0
    %800 = vmatpush1.bf16.msra.mxu0 0
    %801 = vmatprep.subr.bf16.mxu0 0
    %802 = vmatpush1.bf16.msra.mxu0 0
    %803 = vmatprep.subr.bf16.mxu0 0
    %804 = vmatpush1.bf16.msra.mxu0 0
    %805 = vmatprep.subr.bf16.mxu0 0
    %806 = vmatpush1.bf16.msra.mxu0 0
    %807 = vmatprep.subr.bf16.mxu0 0
    %808 = vmatpush1.bf16.msra.mxu0 0
    %809 = vmatprep.subr.bf16.mxu0 0
    %810 = vmatpush1.bf16.msra.mxu0 0
    %811 = vmatprep.subr.bf16.mxu0 0
    %812 = vmatpush1.bf16.msra.mxu0 0
    %813 = vmatprep.subr.bf16.mxu0 0
    %814 = vmatpush1.bf16.msra.mxu0 0
    %815 = vmatprep.subr.bf16.mxu0 0
    %816 = vmatpush1.bf16.msra.mxu0 0
    %817 = vmatprep.subr.bf16.mxu0 0
    %818 = vmatpush1.bf16.msra.mxu0 0
    %819 = vmatprep.subr.bf16.mxu0 0
    %820 = vmatpush1.bf16.msra.mxu0 0
    %821 = vmatprep.mubr.bf16.mxu0 0
    %822 = vmatmul.mubr.bf16.gmra.mrb[0].mxu0 %v766
    %v823 = vpop.f32.mrb[0].mxu0
    %v824 = vadd.f32 %v752, %v823
    %v825 = vpop.f32.mrb[0].mxu0
    %v826 = vpop.f32.mrb[0].mxu0
    %v827 = vadd.f32 %v752, %v826
    %v828 = vpop.f32.mrb[0].mxu0
    %829 = vmatprep.mubr.bf16.mxu0 0
    %830 = vmatmul.mubr.bf16.gmra.mrb[0].mxu0 %v769
    %v831 = vpop.f32.mrb[0].mxu0
    %v832 = vadd.f32 %v752, %v831
    %v833 = vpop.f32.mrb[0].mxu0
    %v834 = vpop.f32.mrb[0].mxu0
    %v835 = vadd.f32 %v752, %v834
    %v836 = vpop.f32.mrb[0].mxu0
    %837 = vmatprep.mubr.bf16.mxu0 0
    %838 = vmatmul.mubr.bf16.gmra.mrb[0].mxu0 %v772
    %v839 = vpop.f32.mrb[0].mxu0
    %v840 = vadd.f32 %v752, %v839
    %v841 = vpop.f32.mrb[0].mxu0
    %v842 = vpop.f32.mrb[0].mxu0
    %v843 = vadd.f32 %v752, %v842
    %v844 = vpop.f32.mrb[0].mxu0
    %845 = vmatprep.mubr.bf16.mxu0 0
    %846 = vmatmul.mubr.bf16.gmra.mrb[0].mxu0 %v775
    %v847 = vpop.f32.mrb[0].mxu0
    %v848 = vadd.f32 %v752, %v847
    %v849 = vpop.f32.mrb[0].mxu0
    %v850 = vpop.f32.mrb[0].mxu0
    %v851 = vadd.f32 %v752, %v850
    %v852 = vpop.f32.mrb[0].mxu0
    %853 = vmatprep.mubr.bf16.mxu0 0
    %854 = vmatmul.mubr.bf16.gmra.mrb[0].mxu0 %v778
    %v855 = vpop.f32.mrb[0].mxu0
    %v856 = vadd.f32 %v752, %v855
    %v857 = vpop.f32.mrb[0].mxu0
    %v858 = vpop.f32.mrb[0].mxu0
    %v859 = vadd.f32 %v752, %v858
    %v860 = vpop.f32.mrb[0].mxu0
    %861 = vmatprep.mubr.bf16.mxu0 0
    %862 = vmatmul.mubr.bf16.gmra.mrb[0].mxu0 %v781
    %v863 = vpop.f32.mrb[0].mxu0
    %v864 = vadd.f32 %v752, %v863
    %v865 = vpop.f32.mrb[0].mxu0
    %v866 = vpop.f32.mrb[0].mxu0
    %v867 = vadd.f32 %v752, %v866
    %v868 = vpop.f32.mrb[0].mxu0
    %869 = vmatprep.mubr.bf16.mxu0 0
    %870 = vmatmul.mubr.bf16.gmra.mrb[0].mxu0 %v784
    %v871 = vpop.f32.mrb[0].mxu0
    %v872 = vadd.f32 %v752, %v871
    %v873 = vpop.f32.mrb[0].mxu0
    %v874 = vpop.f32.mrb[0].mxu0
    %v875 = vadd.f32 %v752, %v874
    %v876 = vpop.f32.mrb[0].mxu0
    %877 = vmatprep.mubr.bf16.mxu0 0
    %878 = vmatmul.mubr.bf16.gmra.mrb[0].mxu0 %v787
    %v879 = vpop.f32.mrb[0].mxu0
    %v880 = vadd.f32 %v752, %v879
    %v881 = vpop.f32.mrb[0].mxu0
    %v882 = vpop.f32.mrb[0].mxu0
    %v883 = vadd.f32 %v752, %v882
    %v884 = vpop.f32.mrb[0].mxu0
    %885 = vdwg.mxu0
    %s886 = scalar_lea.vmem %s4, 32
    %v887 = vld [vmem:[%s886] sm:$0xf]
    %v888 = vld [vmem:[%s886 + $0x4] sm:$0xf]
    %v889 = vld [vmem:[%s886 + $0x8] sm:$0xf]
    %v890 = vld [vmem:[%s886 + $0xc] sm:$0xf]
    %v891 = vld [vmem:[%s5 + $0x5] sm:$0x1]
    %v892 = vlaneseq
    %v893 = vshrl.u32 %v892, 7
    %v894 = vsub.s32 0, %v893
    %v895 = vrot.slane %v891, %v894
    %v900 = vunpack.c.l.b16 %v887
    %v901 = vunpack.c.l.b16 %v888
    %v902 = vunpack.c.l.b16 %v889
    %v903 = vunpack.c.l.b16 %v890
    %v904 = vpack.c.b16 %v901, %v900
    %v905 = vpack.c.b16 %v903, %v902
    %908 = vmatprep.subr.bf16.mxu0 0
    %909 = vmatpush1.bf16.msra.mxu0 %v904
    %910 = vmatprep.subr.bf16.mxu0 0
    %911 = vmatpush1.bf16.msra.mxu0 %v905
    %912 = vmatprep.subr.bf16.mxu0 0
    %913 = vmatpush1.bf16.msra.mxu0 0
    %914 = vmatprep.subr.bf16.mxu0 0
    %915 = vmatpush1.bf16.msra.mxu0 0
    %916 = vmatprep.subr.bf16.mxu0 0
    %917 = vmatpush1.bf16.msra.mxu0 0
    %918 = vmatprep.subr.bf16.mxu0 0
    %919 = vmatpush1.bf16.msra.mxu0 0
    %920 = vmatprep.subr.bf16.mxu0 0
    %921 = vmatpush1.bf16.msra.mxu0 0
    %922 = vmatprep.subr.bf16.mxu0 0
    %923 = vmatpush1.bf16.msra.mxu0 0
    %924 = vmatprep.subr.bf16.mxu0 0
    %925 = vmatpush1.bf16.msra.mxu0 0
    %926 = vmatprep.subr.bf16.mxu0 0
    %927 = vmatpush1.bf16.msra.mxu0 0
    %928 = vmatprep.subr.bf16.mxu0 0
    %929 = vmatpush1.bf16.msra.mxu0 0
    %930 = vmatprep.subr.bf16.mxu0 0
    %931 = vmatpush1.bf16.msra.mxu0 0
    %932 = vmatprep.subr.bf16.mxu0 0
    %933 = vmatpush1.bf16.msra.mxu0 0
    %934 = vmatprep.subr.bf16.mxu0 0
    %935 = vmatpush1.bf16.msra.mxu0 0
    %936 = vmatprep.subr.bf16.mxu0 0
    %937 = vmatpush1.bf16.msra.mxu0 0
    %938 = vmatprep.subr.bf16.mxu0 0
    %939 = vmatpush1.bf16.msra.mxu0 0
    %940 = vmatprep.mubr.bf16.mxu0 0
    %941 = vmatmul.mubr.bf16.gmra.mrb[0].mxu0 %v766
    %v942 = vpop.f32.mrb[0].mxu0
    %v943 = vadd.f32 %v895, %v942
    %v944 = vpop.f32.mrb[0].mxu0
    %v945 = vpop.f32.mrb[0].mxu0
    %v946 = vadd.f32 %v895, %v945
    %v947 = vpop.f32.mrb[0].mxu0
    %948 = vmatprep.mubr.bf16.mxu0 0
    %949 = vmatmul.mubr.bf16.gmra.mrb[0].mxu0 %v769
    %v950 = vpop.f32.mrb[0].mxu0
    %v951 = vadd.f32 %v895, %v950
    %v952 = vpop.f32.mrb[0].mxu0
    %v953 = vpop.f32.mrb[0].mxu0
    %v954 = vadd.f32 %v895, %v953
    %v955 = vpop.f32.mrb[0].mxu0
    %956 = vmatprep.mubr.bf16.mxu0 0
    %957 = vmatmul.mubr.bf16.gmra.mrb[0].mxu0 %v772
    %v958 = vpop.f32.mrb[0].mxu0
    %v959 = vadd.f32 %v895, %v958
    %v960 = vpop.f32.mrb[0].mxu0
    %v961 = vpop.f32.mrb[0].mxu0
    %v962 = vadd.f32 %v895, %v961
    %v963 = vpop.f32.mrb[0].mxu0
    %964 = vmatprep.mubr.bf16.mxu0 0
    %965 = vmatmul.mubr.bf16.gmra.mrb[0].mxu0 %v775
    %v966 = vpop.f32.mrb[0].mxu0
    %v967 = vadd.f32 %v895, %v966
    %v968 = vpop.f32.mrb[0].mxu0
    %v969 = vpop.f32.mrb[0].mxu0
    %v970 = vadd.f32 %v895, %v969
    %v971 = vpop.f32.mrb[0].mxu0
    %972 = vmatprep.mubr.bf16.mxu0 0
    %973 = vmatmul.mubr.bf16.gmra.mrb[0].mxu0 %v778
    %v974 = vpop.f32.mrb[0].mxu0
    %v975 = vadd.f32 %v895, %v974
    %v976 = vpop.f32.mrb[0].mxu0
    %v977 = vpop.f32.mrb[0].mxu0
    %v978 = vadd.f32 %v895, %v977
    %v979 = vpop.f32.mrb[0].mxu0
    %980 = vmatprep.mubr.bf16.mxu0 0
    %981 = vmatmul.mubr.bf16.gmra.mrb[0].mxu0 %v781
    %v982 = vpop.f32.mrb[0].mxu0
    %v983 = vadd.f32 %v895, %v982
    %v984 = vpop.f32.mrb[0].mxu0
    %v985 = vpop.f32.mrb[0].mxu0
    %v986 = vadd.f32 %v895, %v985
    %v987 = vpop.f32.mrb[0].mxu0
    %988 = vmatprep.mubr.bf16.mxu0 0
    %989 = vmatmul.mubr.bf16.gmra.mrb[0].mxu0 %v784
    %v990 = vpop.f32.mrb[0].mxu0
    %v991 = vadd.f32 %v895, %v990
    %v992 = vpop.f32.mrb[0].mxu0
    %v993 = vpop.f32.mrb[0].mxu0
    %v994 = vadd.f32 %v895, %v993
    %v995 = vpop.f32.mrb[0].mxu0
    %996 = vmatprep.mubr.bf16.mxu0 0
    %997 = vmatmul.mubr.bf16.gmra.mrb[0].mxu0 %v787
    %v998 = vpop.f32.mrb[0].mxu0
    %v999 = vadd.f32 %v895, %v998
    %v1000 = vpop.f32.mrb[0].mxu0
    %v1001 = vpop.f32.mrb[0].mxu0
    %v1002 = vadd.f32 %v895, %v1001
    %v1003 = vpop.f32.mrb[0].mxu0
    %1004 = vdwg.mxu0
    %v1005 = vpack.c.bf16 %v737, %v737
    %v1006 = vpack.c.bf16 %v740, %v740
    %v1007 = vpack.c.bf16 %v827, %v824
    %v1008 = vpack.c.bf16 %v835, %v832
    %v1009 = vpack.c.bf16 %v843, %v840
    %v1010 = vpack.c.bf16 %v851, %v848
    %v1011 = vpack.c.bf16 %v859, %v856
    %v1012 = vpack.c.bf16 %v867, %v864
    %v1013 = vpack.c.bf16 %v875, %v872
    %v1014 = vpack.c.bf16 %v883, %v880
    %v1016 = vsel %vm417, %v1005, 0
    %v1019 = vsel %vm417, %v1007, 0
    %v1022 = vsel %vm417, %v1008, 0
    %v1025 = vsel %vm417, %v1009, 0
    %v1028 = vsel %vm417, %v1010, 0
    %1030 = vmatprep.subr.bf16.mxu0 0
    %1031 = vmatpush1.bf16.xpose.msra.mxu0 %v1019
    %1032 = vmatprep.subr.bf16.mxu0 0
    %1033 = vmatpush1.bf16.xpose.msra.mxu0 %v1022
    %1034 = vmatprep.subr.bf16.mxu0 0
    %1035 = vmatpush1.bf16.xpose.msra.mxu0 %v1025
    %1036 = vmatprep.subr.bf16.mxu0 0
    %1037 = vmatpush1.bf16.xpose.msra.mxu0 %v1028
    %1038 = vmatprep.subr.bf16.mxu0 0
    %1039 = vmatpush1.bf16.xpose.msra.mxu0 0
    %1040 = vmatprep.subr.bf16.mxu0 0
    %1041 = vmatpush1.bf16.xpose.msra.mxu0 0
    %1042 = vmatprep.subr.bf16.mxu0 0
    %1043 = vmatpush1.bf16.xpose.msra.mxu0 0
    %1044 = vmatprep.subr.bf16.mxu0 0
    %1045 = vmatpush1.bf16.xpose.msra.mxu0 0
    %1046 = vmatprep.subr.bf16.mxu0 0
    %1047 = vmatpush1.bf16.xpose.msra.mxu0 0
    %1048 = vmatprep.subr.bf16.mxu0 0
    %1049 = vmatpush1.bf16.xpose.msra.mxu0 0
    %1050 = vmatprep.subr.bf16.mxu0 0
    %1051 = vmatpush1.bf16.xpose.msra.mxu0 0
    %1052 = vmatprep.subr.bf16.mxu0 0
    %1053 = vmatpush1.bf16.xpose.msra.mxu0 0
    %1054 = vmatprep.subr.bf16.mxu0 0
    %1055 = vmatpush1.bf16.xpose.msra.mxu0 0
    %1056 = vmatprep.subr.bf16.mxu0 0
    %1057 = vmatpush1.bf16.xpose.msra.mxu0 0
    %1058 = vmatprep.subr.bf16.mxu0 0
    %1059 = vmatpush1.bf16.xpose.msra.mxu0 0
    %1060 = vmatprep.subr.bf16.mxu0 0
    %1061 = vmatpush1.bf16.xpose.msra.mxu0 0
    %1062 = vmatprep.mubr.bf16.mxu0 0
    %1063 = vmatmul.mubr.bf16.gmra.mrb[0].mxu0 %v1016
    %v1064 = vpop.f32.mrb[0].mxu0
    %v1065 = vadd.f32 0.0, %v1064
    %v1066 = vpop.f32.mrb[0].mxu0
    %v1067 = vpop.f32.mrb[0].mxu0
    %v1068 = vpop.f32.mrb[0].mxu0
    %1069 = vdwg.mxu0
    %v1071 = vsel %vm417, %v1006, 0
    %v1074 = vsel %vm417, %v1011, 0
    %v1077 = vsel %vm417, %v1012, 0
    %v1080 = vsel %vm417, %v1013, 0
    %v1083 = vsel %vm417, %v1014, 0
    %1085 = vmatprep.subr.bf16.mxu0 0
    %1086 = vmatpush1.bf16.xpose.msra.mxu0 %v1074
    %1087 = vmatprep.subr.bf16.mxu0 0
    %1088 = vmatpush1.bf16.xpose.msra.mxu0 %v1077
    %1089 = vmatprep.subr.bf16.mxu0 0
    %1090 = vmatpush1.bf16.xpose.msra.mxu0 %v1080
    %1091 = vmatprep.subr.bf16.mxu0 0
    %1092 = vmatpush1.bf16.xpose.msra.mxu0 %v1083
    %1093 = vmatprep.subr.bf16.mxu0 0
    %1094 = vmatpush1.bf16.xpose.msra.mxu0 0
    %1095 = vmatprep.subr.bf16.mxu0 0
    %1096 = vmatpush1.bf16.xpose.msra.mxu0 0
    %1097 = vmatprep.subr.bf16.mxu0 0
    %1098 = vmatpush1.bf16.xpose.msra.mxu0 0
    %1099 = vmatprep.subr.bf16.mxu0 0
    %1100 = vmatpush1.bf16.xpose.msra.mxu0 0
    %1101 = vmatprep.subr.bf16.mxu0 0
    %1102 = vmatpush1.bf16.xpose.msra.mxu0 0
    %1103 = vmatprep.subr.bf16.mxu0 0
    %1104 = vmatpush1.bf16.xpose.msra.mxu0 0
    %1105 = vmatprep.subr.bf16.mxu0 0
    %1106 = vmatpush1.bf16.xpose.msra.mxu0 0
    %1107 = vmatprep.subr.bf16.mxu0 0
    %1108 = vmatpush1.bf16.xpose.msra.mxu0 0
    %1109 = vmatprep.subr.bf16.mxu0 0
    %1110 = vmatpush1.bf16.xpose.msra.mxu0 0
    %1111 = vmatprep.subr.bf16.mxu0 0
    %1112 = vmatpush1.bf16.xpose.msra.mxu0 0
    %1113 = vmatprep.subr.bf16.mxu0 0
    %1114 = vmatpush1.bf16.xpose.msra.mxu0 0
    %1115 = vmatprep.subr.bf16.mxu0 0
    %1116 = vmatpush1.bf16.xpose.msra.mxu0 0
    %1117 = vmatprep.mubr.bf16.mxu0 0
    %1118 = vmatmul.mubr.bf16.gmra.mrb[0].mxu0 %v1071
    %v1119 = vpop.f32.mrb[0].mxu0
    %v1120 = vadd.f32 0.0, %v1119
    %v1121 = vpop.f32.mrb[0].mxu0
    %v1122 = vpop.f32.mrb[0].mxu0
    %v1123 = vpop.f32.mrb[0].mxu0
    %1124 = vdwg.mxu0
    %vm1125 = vcmask 523264
    %v1126 = vsel %vm1125, %v1065, -inf
    %1127 = vmax.xlane.f32.xlu0 %v1126
    %v1128 = vpop.xlane.xlu0 %1127
    %v1129 = vsel %vm1125, %v1120, -inf
    %1130 = vmax.xlane.f32.xlu0 %v1129
    %v1131 = vpop.xlane.xlu0 %1130
    %v1132 = vsub.f32 %v1065, %v1128
    %v1133 = vsub.f32 %v1120, %v1131
    %v1134 = vmul.f32 %v1132, 1.442695
    %v1135 = vpow.pop %v1134
    %v1136 = vmul.f32 %v1133, 1.442695
    %v1137 = vpow.pop %v1136
    %v1138 = vsel %vm1125, %v1135, 0.0
    %1139 = vadd.xlane.f32.xlu0 %v1138
    %v1140 = vpop.xlane.xlu0 %1139
    %v1141 = vsel %vm1125, %v1137, 0.0
    %1142 = vadd.xlane.f32.xlu0 %v1141
    %v1143 = vpop.xlane.xlu0 %1142
    %v1144 = vrcp.pop %v1140
    %v1145 = vrcp.pop %v1143
    %v1146 = vmul.f32 %v1135, %v1144
    %v1147 = vmul.f32 %v1137, %v1145
    %v1148 = vpack.c.bf16 %v1146, %v1146
    %v1149 = vpack.c.bf16 %v1147, %v1147
    %v1150 = vpack.c.bf16 %v946, %v943
    %v1151 = vpack.c.bf16 %v954, %v951
    %v1152 = vpack.c.bf16 %v962, %v959
    %v1153 = vpack.c.bf16 %v970, %v967
    %v1154 = vpack.c.bf16 %v978, %v975
    %v1155 = vpack.c.bf16 %v986, %v983
    %v1156 = vpack.c.bf16 %v994, %v991
    %v1157 = vpack.c.bf16 %v1002, %v999
    %v1159 = vsel %vm1125, %v1148, 0
    %1161 = vmatprep.subr.bf16.mxu0 0
    %1162 = vmatpush1.bf16.msra.mxu0 %v1150
    %1163 = vmatprep.subr.bf16.mxu0 0
    %1164 = vmatpush1.bf16.msra.mxu0 %v1151
    %1165 = vmatprep.subr.bf16.mxu0 0
    %1166 = vmatpush1.bf16.msra.mxu0 %v1152
    %1167 = vmatprep.subr.bf16.mxu0 0
    %1168 = vmatpush1.bf16.msra.mxu0 %v1153
    %1169 = vmatprep.subr.bf16.mxu0 0
    %1170 = vmatpush1.bf16.msra.mxu0 0
    %1171 = vmatprep.subr.bf16.mxu0 0
    %1172 = vmatpush1.bf16.msra.mxu0 0
    %1173 = vmatprep.subr.bf16.mxu0 0
    %1174 = vmatpush1.bf16.msra.mxu0 0
    %1175 = vmatprep.subr.bf16.mxu0 0
    %1176 = vmatpush1.bf16.msra.mxu0 0
    %1177 = vmatprep.subr.bf16.mxu0 0
    %1178 = vmatpush1.bf16.msra.mxu0 0
    %1179 = vmatprep.subr.bf16.mxu0 0
    %1180 = vmatpush1.bf16.msra.mxu0 0
    %1181 = vmatprep.subr.bf16.mxu0 0
    %1182 = vmatpush1.bf16.msra.mxu0 0
    %1183 = vmatprep.subr.bf16.mxu0 0
    %1184 = vmatpush1.bf16.msra.mxu0 0
    %1185 = vmatprep.subr.bf16.mxu0 0
    %1186 = vmatpush1.bf16.msra.mxu0 0
    %1187 = vmatprep.subr.bf16.mxu0 0
    %1188 = vmatpush1.bf16.msra.mxu0 0
    %1189 = vmatprep.subr.bf16.mxu0 0
    %1190 = vmatpush1.bf16.msra.mxu0 0
    %1191 = vmatprep.subr.bf16.mxu0 0
    %1192 = vmatpush1.bf16.msra.mxu0 0
    %1193 = vmatprep.mubr.bf16.mxu0 0
    %1194 = vmatmul.mubr.bf16.gmra.mrb[0].mxu0 %v1159
    %v1195 = vpop.f32.mrb[0].mxu0
    %v1196 = vadd.f32 0.0, %v1195
    %v1197 = vpop.f32.mrb[0].mxu0
    %v1198 = vpop.f32.mrb[0].mxu0
    %v1199 = vpop.f32.mrb[0].mxu0
    %1200 = vdwg.mxu0
    %v1202 = vsel %vm1125, %v1149, 0
    %1204 = vmatprep.subr.bf16.mxu0 0
    %1205 = vmatpush1.bf16.msra.mxu0 %v1154
    %1206 = vmatprep.subr.bf16.mxu0 0
    %1207 = vmatpush1.bf16.msra.mxu0 %v1155
    %1208 = vmatprep.subr.bf16.mxu0 0
    %1209 = vmatpush1.bf16.msra.mxu0 %v1156
    %1210 = vmatprep.subr.bf16.mxu0 0
    %1211 = vmatpush1.bf16.msra.mxu0 %v1157
    %1212 = vmatprep.subr.bf16.mxu0 0
    %1213 = vmatpush1.bf16.msra.mxu0 0
    %1214 = vmatprep.subr.bf16.mxu0 0
    %1215 = vmatpush1.bf16.msra.mxu0 0
    %1216 = vmatprep.subr.bf16.mxu0 0
    %1217 = vmatpush1.bf16.msra.mxu0 0
    %1218 = vmatprep.subr.bf16.mxu0 0
    %1219 = vmatpush1.bf16.msra.mxu0 0
    %1220 = vmatprep.subr.bf16.mxu0 0
    %1221 = vmatpush1.bf16.msra.mxu0 0
    %1222 = vmatprep.subr.bf16.mxu0 0
    %1223 = vmatpush1.bf16.msra.mxu0 0
    %1224 = vmatprep.subr.bf16.mxu0 0
    %1225 = vmatpush1.bf16.msra.mxu0 0
    %1226 = vmatprep.subr.bf16.mxu0 0
    %1227 = vmatpush1.bf16.msra.mxu0 0
    %1228 = vmatprep.subr.bf16.mxu0 0
    %1229 = vmatpush1.bf16.msra.mxu0 0
    %1230 = vmatprep.subr.bf16.mxu0 0
    %1231 = vmatpush1.bf16.msra.mxu0 0
    %1232 = vmatprep.subr.bf16.mxu0 0
    %1233 = vmatpush1.bf16.msra.mxu0 0
    %1234 = vmatprep.subr.bf16.mxu0 0
    %1235 = vmatpush1.bf16.msra.mxu0 0
    %1236 = vmatprep.mubr.bf16.mxu0 0
    %1237 = vmatmul.mubr.bf16.gmra.mrb[0].mxu0 %v1202
    %v1238 = vpop.f32.mrb[0].mxu0
    %v1239 = vadd.f32 0.0, %v1238
    %v1240 = vpop.f32.mrb[0].mxu0
    %v1241 = vpop.f32.mrb[0].mxu0
    %v1242 = vpop.f32.mrb[0].mxu0
    %1243 = vdwg.mxu0
    %v1244 = vpack.c.bf16 %v1239, %v1196
    %s1245 = scalar_lea.vmem %s4, 48
    %v1246 = vld [vmem:[%s1245] sm:$0xf]
    %v1247 = vld [vmem:[%s1245 + $0x4] sm:$0xf]
    %v1248 = vld [vmem:[%s1245 + $0x8] sm:$0xf]
    %v1249 = vld [vmem:[%s1245 + $0xc] sm:$0xf]
    %v1250 = vld [vmem:[%s5 + $0x6] sm:$0x1]
    %v1251 = vlaneseq
    %v1252 = vshrl.u32 %v1251, 7
    %v1253 = vsub.s32 0, %v1252
    %v1254 = vrot.slane %v1250, %v1253
    %v1259 = vunpack.c.l.b16 %v1246
    %v1260 = vunpack.c.l.b16 %v1247
    %v1261 = vunpack.c.l.b16 %v1248
    %v1262 = vunpack.c.l.b16 %v1249
    %v1263 = vpack.c.b16 %v1260, %v1259
    %v1264 = vpack.c.b16 %v1262, %v1261
    %v1268 = vsel %vm417, %v1244, 0
    %1270 = vmatprep.subr.bf16.mxu0 0
    %1271 = vmatpush1.bf16.msra.mxu0 %v1263
    %1272 = vmatprep.subr.bf16.mxu0 0
    %1273 = vmatpush1.bf16.msra.mxu0 %v1264
    %1274 = vmatprep.subr.bf16.mxu0 0
    %1275 = vmatpush1.bf16.msra.mxu0 0
    %1276 = vmatprep.subr.bf16.mxu0 0
    %1277 = vmatpush1.bf16.msra.mxu0 0
    %1278 = vmatprep.subr.bf16.mxu0 0
    %1279 = vmatpush1.bf16.msra.mxu0 0
    %1280 = vmatprep.subr.bf16.mxu0 0
    %1281 = vmatpush1.bf16.msra.mxu0 0
    %1282 = vmatprep.subr.bf16.mxu0 0
    %1283 = vmatpush1.bf16.msra.mxu0 0
    %1284 = vmatprep.subr.bf16.mxu0 0
    %1285 = vmatpush1.bf16.msra.mxu0 0
    %1286 = vmatprep.subr.bf16.mxu0 0
    %1287 = vmatpush1.bf16.msra.mxu0 0
    %1288 = vmatprep.subr.bf16.mxu0 0
    %1289 = vmatpush1.bf16.msra.mxu0 0
    %1290 = vmatprep.subr.bf16.mxu0 0
    %1291 = vmatpush1.bf16.msra.mxu0 0
    %1292 = vmatprep.subr.bf16.mxu0 0
    %1293 = vmatpush1.bf16.msra.mxu0 0
    %1294 = vmatprep.subr.bf16.mxu0 0
    %1295 = vmatpush1.bf16.msra.mxu0 0
    %1296 = vmatprep.subr.bf16.mxu0 0
    %1297 = vmatpush1.bf16.msra.mxu0 0
    %1298 = vmatprep.subr.bf16.mxu0 0
    %1299 = vmatpush1.bf16.msra.mxu0 0
    %1300 = vmatprep.subr.bf16.mxu0 0
    %1301 = vmatpush1.bf16.msra.mxu0 0
    %1302 = vmatprep.mubr.bf16.mxu0 0
    %1303 = vmatmul.mubr.bf16.gmra.mrb[0].mxu0 %v1268
    %v1304 = vpop.f32.mrb[0].mxu0
    %v1305 = vadd.f32 %v1254, %v1304
    %v1306 = vpop.f32.mrb[0].mxu0
    %v1307 = vpop.f32.mrb[0].mxu0
    %v1308 = vadd.f32 %v1254, %v1307
    %v1309 = vpop.f32.mrb[0].mxu0
    %1310 = vdwg.mxu0
    %v1311 = vadd.f32 %v25, %v1305
    %v1312 = vadd.f32 %v26, %v1308
    %1313 = vst.msk [vmem:[#allocation2] sm:$0xff] %vm417, %v1311
    %1314 = vst.msk [vmem:[#allocation2 + $0x8] sm:$0xff] %vm417, %v1312
    // Predicated region
    $region26: #{_forward_impl.1} parent=1 // pred_check
      _
    $region27: #{_forward_impl.1} parent=1 // pred_check_branch
      %1316 = sbr.rel (0) target = $region29
    $region28: #{_forward_impl.1} parent=1 // pred_region
      %s1318 = ssub.s32 256, 256
      %1319 = vsyncadd [#allocation3], %s1318
      %s1320 = sshll.u32 [#allocation2], 4
      %s1321 = int_to_ptr.vmem [resolvable:$true] %s1320
      %1326 = dma.vmem_to_hbm [thread:$0]  %s1321, 256, %s6, [#allocation3], 128, 128, 8
    $region29: #{_forward_impl.1} parent=1 // pred_fallthru
      _
    // Predicated region
    $region30: #{_forward_impl.1} parent=1 // pred_check
      _
    $region31: #{_forward_impl.1} parent=1 // pred_check_branch
      %1328 = sbr.rel (0) target = $region33
    $region32: #{_forward_impl.1} parent=1 // pred_region
      %1329 = dma.done [#allocation3], 256
    $region33: #{_forward_impl.1} parent=1 // pred_fallthru
      _
    %1330 = vsyncpa [#allocation3], 1

</llo_original>
